<compile_context>
chip_gen: v5e
topology: v5e:2x2
jax: 0.10.0
libtpu: 0.0.40
codegen_flags: <defaults>
</compile_context>

<pallas_src>
import functools

import numpy as np
import jax
import jax.numpy as jnp
from jax import lax
from jax.experimental import pallas as pl
from jax.experimental.pallas import tpu as pltpu

F32_MAX = float(np.finfo(np.float32).max)

_LANE = 128
_SUB = 8
_MAX_BLOCK_ROWS = 2048   # (2048,128) f32 = 1 MiB/tile, 2 MiB double-buffered (safe on v5e)
_MAX_TM = 4096


def _round_up(a, b):
    return ((a + b - 1) // b) * b


def _prep_dtype(x):
    # keep bf16/f16 in native dtype (cast inside the kernel); promote everything
    # else (ints, f64) to f32 in the wrapper.
    if (not jnp.issubdtype(x.dtype, jnp.floating)) or x.dtype.itemsize > 4:
        x = x.astype(jnp.float32)
    return x


# ----------------------------------------------------------------------------
# Kernel A: default mode
#   loss = sum( min( (x - clamp(x, min, max))^2 , F32_MAX ) ) * volumeElement
# ----------------------------------------------------------------------------
def _range_loss_kernel(x_ref, o_ref, *, min_w, max_w, block_rows, inner,
                       full_rows, rem, apply_mask):
    p = pl.program_id(0)
    i = pl.program_id(1)

    @pl.when(i == 0)
    def _():
        o_ref[...] = jnp.zeros_like(o_ref)

    x = x_ref[...].astype(jnp.float32)                 # (block_rows, 128)
    xd = x - jnp.clip(x, min_w, max_w)
    # remove_infs_from_variable: xd*xd >= 0, so only the upper clamp matters
    sq = jnp.minimum(xd * xd, F32_MAX)

    def _accumulate(vals):
        # tile-aligned reshape: groups of 8 rows -> whole vregs; pure VPU adds
        o_ref[...] += jnp.sum(vals.reshape(block_rows // _SUB, _SUB, _LANE), axis=0)

    if not apply_mask:
        _accumulate(sq)
    else:
        blk = p * inner + i
        needs_mask = (blk + 1) * block_rows > full_rows

        @pl.when(jnp.logical_not(needs_mask))
        def _():
            _accumulate(sq)

        @pl.when(needs_mask)
        def _():
            g_row = blk * block_rows + lax.broadcasted_iota(jnp.int32, sq.shape, 0)
            lane = lax.broadcasted_iota(jnp.int32, sq.shape, 1)
            valid = (g_row < full_rows) | ((g_row == full_rows) & (lane < rem))
            _accumulate(jnp.where(valid, sq, 0.0))


def _default_range_loss(x, vol, min_w, max_w):
    x = _prep_dtype(x)
    xf = x.reshape(-1)
    n = int(xf.shape[0])
    sub = {4: 8, 2: 16, 1: 32}[xf.dtype.itemsize]

    rows = pl.cdiv(n, _LANE)
    if n != rows * _LANE:
        # TODO(synk): tail pad is one extra XLA copy; only hit when numel % 128 != 0.
        xf = jnp.pad(xf, (0, rows * _LANE - n))
    x2 = xf.reshape(rows, _LANE)

    rows_alloc = rows
    if rows_alloc < sub:                               # tiny inputs: pad a few rows
        x2 = jnp.pad(x2, ((0, sub - rows_alloc), (0, 0)))
        rows_alloc = sub

    block_rows = min(_MAX_BLOCK_ROWS, (rows_alloc // sub) * sub)
    num_blocks = pl.cdiv(rows_alloc, block_rows)
    n_par = 2 if num_blocks >= 2 else 1                # shard blocks across v7x TCs
    inner = pl.cdiv(num_blocks, n_par)

    full_rows, rem = n // _LANE, n % _LANE
    apply_mask = not (rem == 0 and rows_alloc == rows
                      and rows_alloc % block_rows == 0
                      and num_blocks == n_par * inner)

    if n_par * inner > num_blocks:
        x_map = lambda p, i: (jnp.minimum(p * inner + i, num_blocks - 1), 0)
    else:
        x_map = lambda p, i: (p * inner + i, 0)

    out = pl.pallas_call(
        functools.partial(_range_loss_kernel, min_w=float(min_w), max_w=float(max_w),
                          block_rows=block_rows, inner=inner,
                          full_rows=full_rows, rem=rem, apply_mask=apply_mask),
        out_shape=jax.ShapeDtypeStruct((n_par * _SUB, _LANE), jnp.float32),
        grid=(n_par, inner),
        in_specs=[pl.BlockSpec((block_rows, _LANE), x_map)],
        out_specs=pl.BlockSpec((_SUB, _LANE), lambda p, i: (p, 0)),
        compiler_params=pltpu.CompilerParams(
            dimension_semantics=("parallel", "arbitrary")),
    )(x2)
    return jnp.sum(out) * vol


# ----------------------------------------------------------------------------
# Kernel B: weighted linear softmax mode
#   offset[m] = mean_c x[c, m]
#   eff[c, m] = weights[c] + x[c, m] - offset[m]
#   loss = sum_{c,m} min( (eff - clamp(eff, min, max))^2 , F32_MAX ) * vol
# ----------------------------------------------------------------------------
def _wls_loss_kernel(x_ref, w_ref, o_ref, *, min_w, max_w, num_c, tm, inner,
                     m_valid, apply_mask):
    p = pl.program_id(0)
    i = pl.program_id(1)

    @pl.when(i == 0)
    def _():
        o_ref[...] = jnp.zeros_like(o_ref)

    x = x_ref[...].astype(jnp.float32)                 # (C, tm)
    w = w_ref[...]                                     # (C, 1) f32
    offset = jnp.sum(x, axis=0, keepdims=True) * (1.0 / num_c)
    eff = w + x - offset
    d = eff - jnp.clip(eff, min_w, max_w)
    sq = jnp.minimum(d * d, F32_MAX)

    if not apply_mask:
        o_ref[...] += sq
    else:
        blk = p * inner + i
        needs_mask = (blk + 1) * tm > m_valid

        @pl.when(jnp.logical_not(needs_mask))
        def _():
            o_ref[...] += sq

        @pl.when(needs_mask)
        def _():
            col = blk * tm + lax.broadcasted_iota(jnp.int32, sq.shape, 1)
            o_ref[...] += jnp.where(col < m_valid, sq, 0.0)


def _weighted_linear_softmax_loss(x, vol, weights, min_w, max_w, dim):
    x = _prep_dtype(x)
    xm = jnp.moveaxis(x, dim, 0)
    c = int(xm.shape[0])
    m = int(np.prod(xm.shape[1:])) if xm.ndim > 1 else 1
    x2 = xm.reshape(c, m)

    m_pad = _round_up(m, _LANE)
    if m_pad != m:
        # TODO(synk): tail pad is one extra XLA copy; only hit when reduced numel % 128 != 0.
        x2 = jnp.pad(x2, ((0, 0), (0, m_pad - m)))

    # TODO(synk): very large softmax dims (C) would need a two-pass design; C is a
    # channel count in practice so the full-C block always fits VMEM.
    tm_cap = max(_LANE, ((2 << 20) // (max(1, c) * 4)) // _LANE * _LANE)
    tm = min(tm_cap, _MAX_TM, m_pad)
    num_tiles = pl.cdiv(m_pad, tm)
    n_par = 2 if num_tiles >= 2 else 1
    inner = pl.cdiv(num_tiles, n_par)

    apply_mask = not (m == m_pad and m_pad % tm == 0 and num_tiles == n_par * inner)

    if n_par * inner > num_tiles:
        x_map = lambda p, i: (0, jnp.minimum(p * inner + i, num_tiles - 1))
    else:
        x_map = lambda p, i: (0, p * inner + i)

    w2 = jnp.asarray(weights, jnp.float32).reshape(c, 1)

    out = pl.pallas_call(
        functools.partial(_wls_loss_kernel, min_w=float(min_w), max_w=float(max_w),
                          num_c=c, tm=tm, inner=inner, m_valid=m,
                          apply_mask=apply_mask),
        out_shape=jax.ShapeDtypeStruct((n_par, c, tm), jnp.float32),
        grid=(n_par, inner),
        in_specs=[pl.BlockSpec((c, tm), x_map),
                  pl.BlockSpec((c, 1), lambda p, i: (0, 0))],     # weights resident
        out_specs=pl.BlockSpec((1, c, tm), lambda p, i: (p, 0, 0)),
        compiler_params=pltpu.CompilerParams(
            dimension_semantics=("parallel", "arbitrary")),
    )(x2, w2)
    return jnp.sum(out) * vol


# ----------------------------------------------------------------------------
# Wrapper matching WeightInputRangeLoss.forward
# ----------------------------------------------------------------------------
def weight_input_range_loss(x, spacing=None, use_weighted_linear_softmax=False,
                            weights=None, min_weight=0.0, max_weight=1.0, dim=None):
    if spacing is not None:
        vol = jnp.asarray(spacing, jnp.float32).prod()
    else:
        vol = jnp.float32(1.0)

    if not use_weighted_linear_softmax:
        return _default_range_loss(x, vol, min_weight, max_weight)
    else:
        if weights is None or dim is None:
            raise ValueError(
                "Weights and dim need to be defined to use the weighted linear softmax")
        return _weighted_linear_softmax_loss(x, vol, weights, min_weight, max_weight, dim)


if __name__ == "__main__":
    key = jax.random.PRNGKey(0)
    kx, kw = jax.random.split(key, 2)

    # NCHW-like input, values intentionally spilling outside [0, 1]
    x = jax.random.normal(kx, (2, 4, 16, 16), dtype=jnp.float32) * 2.0
    spacing = jnp.array([0.5, 0.25], dtype=jnp.float32)
    weights = jax.random.normal(kw, (4,), dtype=jnp.float32)

    # mode 1: default range loss
    loss_a = weight_input_range_loss(x, spacing, min_weight=0.0, max_weight=1.0)
    # mode 2: weighted linear softmax loss over channel dim
    loss_b = weight_input_range_loss(x, spacing, use_weighted_linear_softmax=True,
                                     weights=weights, min_weight=0.0, max_weight=1.0,
                                     dim=1)
    jax.block_until_ready((loss_a, loss_b))

    # pure-JAX references
    vol = spacing.prod()
    xd = x - jnp.clip(x, 0.0, 1.0)
    ref_a = jnp.sum(xd * xd) * vol

    off = x.sum(axis=1) / x.shape[1]
    ref_b = jnp.float32(0.0)
    for c in range(x.shape[1]):
        eff = weights[c] + x[:, c] - off
        d = eff - jnp.clip(eff, 0.0, 1.0)
        ref_b = ref_b + jnp.sum(d * d) * vol

    np.testing.assert_allclose(np.asarray(loss_a), np.asarray(ref_a), rtol=1e-4, atol=1e-5)
    np.testing.assert_allclose(np.asarray(loss_b), np.asarray(ref_b), rtol=1e-4, atol=1e-5)

    # second config: odd shapes exercising tail masking + multi-block / 2-core grid
    x3 = jax.random.normal(jax.random.PRNGKey(1), (3, 5, 9, 11), dtype=jnp.float32) * 3.0
    w3 = jax.random.normal(jax.random.PRNGKey(2), (5,), dtype=jnp.float32)
    loss_c = weight_input_range_loss(x3, None, min_weight=-0.25, max_weight=0.75)
    loss_d = weight_input_range_loss(x3, None, use_weighted_linear_softmax=True,
                                     weights=w3, min_weight=-0.25, max_weight=0.75, dim=1)
    jax.block_until_ready((loss_c, loss_d))

    xd3 = x3 - jnp.clip(x3, -0.25, 0.75)
    ref_c = jnp.sum(xd3 * xd3)
    off3 = x3.sum(axis=1) / x3.shape[1]
    ref_d = jnp.float32(0.0)
    for c in range(x3.shape[1]):
        eff = w3[c] + x3[:, c] - off3
        d = eff - jnp.clip(eff, -0.25, 0.75)
        ref_d = ref_d + jnp.sum(d * d)

    np.testing.assert_allclose(np.asarray(loss_c), np.asarray(ref_c), rtol=1e-4, atol=1e-5)
    np.testing.assert_allclose(np.asarray(loss_d), np.asarray(ref_d), rtol=1e-4, atol=1e-5)

    print("KERNEL_OK")
</pallas_src>

<mosaic_0001>
module attributes {stable_mosaic.version = 11 : i64} {
  func.func @_range_loss_kernel(%arg0: i32, %arg1: i32, %arg2: memref<16x128xf32, #tpu.memory_space<vmem>>, %arg3: memref<8x128xf32, #tpu.memory_space<vmem>>) attributes {dimension_semantics = [#tpu.dimension_semantics<parallel>, #tpu.dimension_semantics<arbitrary>], iteration_bounds = array<i64: 1, 1>, scalar_prefetch = 0 : i64, scratch_operands = 0 : i64, tpu.core_type = #tpu.core_type<tc>, window_params = [{transform_indices = @transform_0, window_bounds = array<i64: 16, 128>}, {transform_indices = @transform_1, window_bounds = array<i64: 8, 128>}]} {
    %c0_i32 = arith.constant 0 : i32
    %0 = arith.cmpi eq, %arg1, %c0_i32 : i32
    %1 = arith.extui %0 : i1 to i32
    %c0_i32_0 = arith.constant 0 : i32
    %2 = arith.cmpi ne, %1, %c0_i32_0 : i32
    scf.if %2 {
      %cst_9 = arith.constant 0.000000e+00 : f32
      %17 = vector.broadcast %cst_9 : f32 to vector<8x128xf32>
      %c0_10 = arith.constant 0 : index
      %c0_11 = arith.constant 0 : index
      %18 = vector.load %arg3[%c0_10, %c0_11] : memref<8x128xf32, #tpu.memory_space<vmem>>, vector<8x128xf32>
      tpu.vector_store %arg3[%c0_10, %c0_11], %17 {strides = array<i32>} : memref<8x128xf32, #tpu.memory_space<vmem>>, vector<8x128xf32>,
    } else {
    }
    %c0 = arith.constant 0 : index
    %c0_1 = arith.constant 0 : index
    %3 = vector.load %arg2[%c0, %c0_1] : memref<16x128xf32, #tpu.memory_space<vmem>>, vector<16x128xf32>
    %cst = arith.constant 0.000000e+00 : f32
    %cst_2 = arith.constant 1.000000e+00 : f32
    %4 = vector.broadcast %cst : f32 to vector<16x128xf32>
    %5 = arith.maximumf %4, %3 : vector<16x128xf32>
    %6 = vector.broadcast %cst_2 : f32 to vector<16x128xf32>
    %7 = arith.minimumf %6, %5 : vector<16x128xf32>
    %8 = arith.subf %3, %7 : vector<16x128xf32>
    %9 = arith.mulf %8, %8 : vector<16x128xf32>
    %cst_3 = arith.constant 3.40282347E+38 : f32
    %10 = vector.broadcast %cst_3 : f32 to vector<16x128xf32>
    %11 = arith.minimumf %9, %10 : vector<16x128xf32>
    %c0_4 = arith.constant 0 : index
    %c0_5 = arith.constant 0 : index
    %12 = vector.load %arg3[%c0_4, %c0_5] : memref<8x128xf32, #tpu.memory_space<vmem>>, vector<8x128xf32>
    %13 = vector.shape_cast %11 : vector<16x128xf32> to vector<2x8x128xf32>
    %cst_6 = arith.constant dense<0.000000e+00> : vector<8x128xf32>
    %14 = vector.multi_reduction <add>, %13, %cst_6 [0] : vector<2x8x128xf32> to vector<8x128xf32>
    %15 = arith.addf %12, %14 : vector<8x128xf32>
    %c0_7 = arith.constant 0 : index
    %c0_8 = arith.constant 0 : index
    %16 = vector.load %arg3[%c0_7, %c0_8] : memref<8x128xf32, #tpu.memory_space<vmem>>, vector<8x128xf32>
    tpu.vector_store %arg3[%c0_7, %c0_8], %15 {strides = array<i32>} : memref<8x128xf32, #tpu.memory_space<vmem>>, vector<8x128xf32>,
    return
  }
  func.func @transform_0(%arg0: i32, %arg1: i32) -> (i32, i32) {
    %c1_i32 = arith.constant 1 : i32
    %0 = arith.muli %arg0, %c1_i32 : i32
    %1 = arith.addi %0, %arg1 : i32
    %c0_i32 = arith.constant 0 : i32
    %c0_i32_0 = arith.constant 0 : i32
    return %1, %c0_i32 : i32, i32
  }
  func.func @transform_1(%arg0: i32, %arg1: i32) -> (i32, i32) {
    %c0_i32 = arith.constant 0 : i32
    %c0_i32_0 = arith.constant 0 : i32
    return %arg0, %c0_i32 : i32, i32
  }
}

</mosaic_0001>

<llo_original>
// kernel: tpu_custom_call.1
$region0: #{tpu_custom_call.1}
  #allocation0 [shape = 'u32[]', space=smem, size = 0x4, offset = 0x4, fixed_abs, tag = 'smem constant byte address 0x4 - core index']
  #allocation1 [shape = 'u32[72,128]{1,0:T(1,128)}', space=vmem, size = 0x9000, scoped, tag = 'internal scratch']
  %s0 = inlined_call_operand.hbm [shape: f32[16,128], index: 0, kind: input, shape index: {}]
  %s1 = inlined_call_operand.hbm [shape: f32[8,128], index: 1, kind: output, shape index: {}]
  %s2 = sld [smem:[#allocation0]]
  $region22: #{tpu_custom_call.1} parent=0
    _
  %s4 = ssub.s32 1, %s2
  %s5 = scalar_select 0, %s4, %s2
  $region1: #{tpu_custom_call.1} parent=0
    #allocation2 [shape = 'u8[8192]{0}', space=vmem, size = 0x2000, scoped, tag = 'input window, operand 0, single buffered']
    #allocation3 [shape = 's32[1]{0}', space=sflag, size = 0x4, scoped, tag = 'scoped memory for tpu_custom_call.1']
    #allocation4 [shape = 's32[1]{0}', space=sflag, size = 0x4, scoped, tag = 'scoped memory for tpu_custom_call.1']
    #allocation5 [shape = 'u8[4096]{0}', space=vmem, size = 0x1000, scoped, tag = 'output window, operand 0, single buffered']
    %6 = vsyncpa [#allocation3], 0
    %7 = vsyncpa [#allocation4], 0
    // Predicated region
    $region2: #{tpu_custom_call.1} parent=1 // pred_check
      _
    $region3: #{tpu_custom_call.1} parent=1 // pred_check_branch
      %9 = sbr.rel (0) target = $region5
    $region4: #{tpu_custom_call.1} parent=1 // pred_region
      %s10 = sadd.s32 0, 0
      %s11 = smul.u32 2, %s10
      %13 = vsyncadd [#allocation3], 0
      %s14 = smul.addr %s11, 8
      %s15 = scalar_lea.hbm %s0, %s14
      %s16 = sshll.u32 %s15, 4
      %s17 = int_to_ptr.hbm [resolvable:$true] %s16
      %s18 = sshll.u32 [#allocation2], 4
      %s19 = int_to_ptr.vmem [resolvable:$true] %s18
      %24 = dma.hbm_to_vmem [thread:$0]  %s17, 256, %s19, [#allocation3], 128, 128, 8
    $region5: #{tpu_custom_call.1} parent=1 // pred_fallthru
      _
    // Predicated region
    $region6: #{tpu_custom_call.1} parent=1 // pred_check
      _
    $region7: #{tpu_custom_call.1} parent=1 // pred_check_branch
      %26 = sbr.rel (0) target = $region9
    $region8: #{tpu_custom_call.1} parent=1 // pred_region
      %28 = dma.done [#allocation3], 256
    $region9: #{tpu_custom_call.1} parent=1 // pred_fallthru
      _
    %s29 = sadd.s32 0, 0
    %s30 = smul.u32 2, %s29
    %p31 = scmp.eq.s32.totalorder 0, 0
    // Predicated region
    $region10: #{tpu_custom_call.1} parent=1 // pred_check
      %p32 = pneg %p31
    $region11: #{tpu_custom_call.1} parent=1 // pred_check_branch
      %34 = sbr.rel (%p32) target = $region13
    $region12: #{tpu_custom_call.1} parent=1 // pred_region
      %35 = vst [vmem:[#allocation5] sm:$0xff] 0.0
    $region13: #{tpu_custom_call.1} parent=1 // pred_fallthru
      _
    %v36 = vld [vmem:[#allocation2] sm:$0xff]
    %v37 = vld [vmem:[#allocation2 + $0x8] sm:$0xff]
    %v38 = vmax.f32 %v36, 0.0
    %v39 = vmax.f32 %v37, 0.0
    %v40 = vmin.f32 %v38, 1.0
    %v41 = vmin.f32 %v39, 1.0
    %v42 = vsub.f32 %v36, %v40
    %v43 = vsub.f32 %v37, %v41
    %v44 = vmul.f32 %v42, %v42
    %v45 = vmul.f32 %v43, %v43
    %v46 = vmin.f32 %v44, 3.4028235e+38
    %v47 = vmin.f32 %v45, 3.4028235e+38
    %v48 = vld [vmem:[#allocation5] sm:$0xff]
    %v49 = vadd.f32 %v46, %v47
    %v50 = vadd.f32 %v48, %v49
    %51 = vst [vmem:[#allocation5] sm:$0xff] %v50
    // Predicated region
    $region14: #{tpu_custom_call.1} parent=1 // pred_check
      _
    $region15: #{tpu_custom_call.1} parent=1 // pred_check_branch
      %53 = sbr.rel (0) target = $region17
    $region16: #{tpu_custom_call.1} parent=1 // pred_region
      %55 = vsyncadd [#allocation4], 0
      %s57 = sshll.u32 [#allocation5], 4
      %s58 = int_to_ptr.vmem [resolvable:$true] %s57
      %s59 = sshll.u32 %s1, 4
      %s60 = int_to_ptr.hbm [resolvable:$true] %s59
      %62 = dma.vmem_to_hbm [thread:$0]  %s58, 128, %s60, [#allocation4]
    $region17: #{tpu_custom_call.1} parent=1 // pred_fallthru
      _
    // Predicated region
    $region18: #{tpu_custom_call.1} parent=1 // pred_check
      _
    $region19: #{tpu_custom_call.1} parent=1 // pred_check_branch
      %64 = sbr.rel (0) target = $region21
    $region20: #{tpu_custom_call.1} parent=1 // pred_region
      %66 = dma.done [#allocation4], 128
    $region21: #{tpu_custom_call.1} parent=1 // pred_fallthru
      _
    %67 = vsyncpa [#allocation3], 1
    %68 = vsyncpa [#allocation4], 1

</llo_original>
